<compile_context>
chip_gen: v7x
topology: tpu7x:2x2x1
jax: 0.10.0
libtpu: 0.0.40
codegen_flags: <defaults>
</compile_context>

<pallas_src>
import jax
import jax.numpy as jnp
from jax.experimental import pallas as pl
from jax.experimental.pallas import tpu as pltpu


def _add_pos_kernel(x_ref, pos_ref, o_ref):
    # (TB, TN) + (1, TN): broadcast over the batch tile on the VPU.  Casting
    # the (small, resident) pos tile here rides free VPU slack instead of
    # paying a separate, un-hidden XLA cast per forward call in the wrapper.
    o_ref[...] = (x_ref[...] + pos_ref[...].astype(x_ref.dtype)).astype(o_ref.dtype)


def _tpu_generation_defaults():
    """Return (target_tile_bytes, vmem_capacity_bytes) for the local TPU."""
    target = 2 << 20      # v5e/v6e: ~1-2 MiB tiles measured at 85-86% of HBM roofline
    vmem_cap = 64 << 20   # conservative floor (v7x: 64 MiB/TC; v5e/v6e: 128 MiB)
    kind = ""
    try:
        kind = str(jax.devices()[0].device_kind).lower()
    except Exception:
        pass
    try:
        info = pltpu.get_tpu_info()
        vmem_cap = int(getattr(info, "vmem_capacity_bytes", vmem_cap))
    except Exception:
        pass
    if "v7" in kind or "tpu7" in kind:
        # 3.2 TB/s HBM: a 2 MiB tile is only ~0.6-1.25 us of DMA vs ~0.35 us of
        # fixed per-step overhead; ~8 MiB tiles push toward ~90%+ of roofline
        # and still fit 64 MiB/TC when double-buffered.
        target = 8 << 20
    return target, vmem_cap


def _choose_tiles(B, N, itemsize, target_bytes, min_steps=8):
    """Pick (tb, tn) block extents for the flattened [B, N] layout.

    tn is a multiple of 128 (lane-dense, unmasked stores) or the full row; tb
    is the full batch or a dtype-aware multiple of the sublane pack (8 for f32,
    16 for bf16, 32 for int8/fp8).  The grid uses pl.cdiv, so neither extent
    has to divide the array -- ragged tail blocks are masked by the pipeline.
    """
    LANE = 128
    sub = max(8, 32 // itemsize)
    target_elems = max(LANE, target_bytes // itemsize)

    # Batch (sublane) tile.
    if B <= sub:
        tb = B
    else:
        want_tb = max(1, target_elems // max(N, 1))
        tb = min(B, max(sub, (want_tb // sub) * sub))

    # Lane tile over the flattened feature axis.
    per_row = max(LANE, target_elems // tb)
    if per_row >= N or N <= LANE:
        tn = N
    else:
        tn = max(LANE, (per_row // LANE) * LANE)

    # Give the pipeline (and v7x's two TensorCores) several grid steps to
    # overlap, but never shred tiles below ~1 MiB just to manufacture steps.
    min_tile_bytes = 1 << 20
    steps = pl.cdiv(N, tn) * pl.cdiv(B, tb)
    while steps < min_steps and tn > LANE and tb * tn * itemsize > 2 * min_tile_bytes:
        tn = max(LANE, ((tn // 2) // LANE) * LANE)
        steps = pl.cdiv(N, tn) * pl.cdiv(B, tb)
    return tb, tn


def pos_embedding_forward(x, pos_embed, *, target_tile_bytes=None, donate_x=False):
    """x: [B, *shape, D], pos_embed: [1, *shape, D] -> x + pos_embed.

    Output dtype follows x (inference convention).  NOTE: PyTorch's bf16(x) +
    f32(pos) add would promote to and return f32; here the add is in x's dtype.
    """
    assert x.ndim >= 2, x.shape
    B = x.shape[0]
    feat_shape = x.shape[1:]
    assert pos_embed.shape == (1,) + tuple(feat_shape), (pos_embed.shape, x.shape)

    N = 1
    for s in feat_shape:
        N *= int(s)

    # Lane-dense flattened layout (row-major trailing-dim collapse => metadata-
    # only reshape, no data movement).
    x2 = x.reshape(B, N)
    pos2 = pos_embed.reshape(1, N)

    target_default, vmem_cap = _tpu_generation_defaults()
    if target_tile_bytes is None:
        target_tile_bytes = target_default
    # Keep the double-buffered working set (x + out + pos) inside VMEM.
    target_tile_bytes = min(int(target_tile_bytes),
                            max(1 << 20, (vmem_cap - (8 << 20)) // 6))

    itemsize = jnp.dtype(x.dtype).itemsize
    tb, tn = _choose_tiles(B, N, itemsize, target_tile_bytes)

    # Batch axis innermost: the pos block index does not change across it, so
    # each pos tile stays resident in VMEM for the whole inner loop.
    grid = (pl.cdiv(N, tn), pl.cdiv(B, tb))

    tile_bytes = tb * tn * itemsize
    pos_bytes = tn * jnp.dtype(pos_embed.dtype).itemsize
    needed = 2 * tile_bytes + 2 * tile_bytes + 2 * pos_bytes  # dbl-buffered x, out, pos
    vmem_limit = int(min(max(int(1.5 * needed), 16 << 20), vmem_cap - (4 << 20)))

    out2 = pl.pallas_call(
        _add_pos_kernel,
        out_shape=jax.ShapeDtypeStruct((B, N), x.dtype),
        grid_spec=pltpu.PrefetchScalarGridSpec(
            num_scalar_prefetch=0,
            grid=grid,
            in_specs=[
                # x: one lane-dense (tb, tn) tile per grid step.
                pl.BlockSpec((tb, tn), lambda nb, bb: (bb, nb)),
                # pos: index independent of the inner (batch) axis -> resident.
                pl.BlockSpec((1, tn), lambda nb, bb: (0, nb)),
                # TODO(synk): on v7x, sweep pipeline_mode=pl.Buffered(3) on the
                # x spec if xprof shows exposed DMA at grid-step boundaries.
            ],
            out_specs=pl.BlockSpec((tb, tn), lambda nb, bb: (bb, nb)),
        ),
        compiler_params=pltpu.CompilerParams(
            dimension_semantics=("parallel", "parallel"),
            vmem_limit_bytes=vmem_limit,
        ),
        # Callers that donate x can reuse its HBM buffer for the output.
        input_output_aliases={0: 0} if donate_x else {},
    )(x2, pos2)
    return out2.reshape(x.shape)


def init_pos_embed(key, shape, dim, std=0.02, dtype=jnp.float32):
    """Learned positional embedding [1, *shape, dim], trunc_normal(std), same
    as the non-sinusoidal nn.Parameter path of the PyTorch module.
    (The module's sinusoidal branch also ends up overwritten by trunc_normal_,
    so the learned init is the effective behavior either way.)"""
    if isinstance(shape, int):
        full_shape = (1, shape, dim)
    else:
        full_shape = (1, *tuple(shape), dim)
    # trunc_normal_ truncates at +/- 2 std by default.
    return jax.random.truncated_normal(key, -2.0, 2.0, full_shape, dtype) * std


if __name__ == "__main__":
    key = jax.random.PRNGKey(0)
    k_x, k_p, k_x2, k_x3, k_p3 = jax.random.split(key, 5)

    # 1) Small shape consistent with the module: batch=2, seq=8, hidden=32.
    B, S, D = 2, 8, 32
    x = jax.random.normal(k_x, (B, S, D), dtype=jnp.float32)
    pos = init_pos_embed(k_p, S, D, std=0.02)
    out = jax.block_until_ready(pos_embedding_forward(x, pos))
    ref = x + pos
    assert out.shape == (B, S, D)
    assert jnp.allclose(out, ref, atol=1e-6, rtol=1e-6)

    # 2) bf16 activations + f32 parameter, tiny target tile to exercise the
    #    multi-step lane-tiled grid (and pos residency across the batch axis).
    B2, S2, D2 = 2, 64, 128
    x2 = jax.random.normal(k_x2, (B2, S2, D2), dtype=jnp.bfloat16)
    pos2 = init_pos_embed(k_p, S2, D2, std=0.02)  # f32 param, cast in-kernel
    out2 = jax.block_until_ready(
        pos_embedding_forward(x2, pos2, target_tile_bytes=4096))
    ref2 = x2 + pos2.astype(jnp.bfloat16)
    assert out2.shape == (B2, S2, D2)
    assert jnp.allclose(out2.astype(jnp.float32), ref2.astype(jnp.float32),
                        atol=1e-2, rtol=1e-2)

    # 3) Ragged case: flattened row length S*D = 300 is not a multiple of the
    #    128-lane tile -> exercises the pl.cdiv grid with a masked tail block.
    B3, S3, D3 = 2, 3, 100
    x3 = jax.random.normal(k_x3, (B3, S3, D3), dtype=jnp.float32)
    pos3 = init_pos_embed(k_p3, S3, D3, std=0.02)
    out3 = jax.block_until_ready(
        pos_embedding_forward(x3, pos3, target_tile_bytes=1024))
    ref3 = x3 + pos3
    assert out3.shape == (B3, S3, D3)
    assert jnp.allclose(out3, ref3, atol=1e-6, rtol=1e-6)

    # TODO(synk): dropout path (drop is not None) would need pltpu.prng_seed /
    # prng_random_bits with grid-invariant per-block seeds; the module default
    # drop=None -> nn.Identity is what is implemented here.
    print("KERNEL_OK")
</pallas_src>

<mosaic_0001>
module attributes {stable_mosaic.version = 11 : i64} {
  func.func @_add_pos_kernel(%arg0: i32, %arg1: i32, %arg2: memref<2x256xf32, #tpu.memory_space<vmem>>, %arg3: memref<1x256xf32, #tpu.memory_space<vmem>>, %arg4: memref<2x256xf32, #tpu.memory_space<vmem>>) attributes {dimension_semantics = [#tpu.dimension_semantics<parallel>, #tpu.dimension_semantics<parallel>], iteration_bounds = array<i64: 1, 1>, scalar_prefetch = 0 : i64, scratch_operands = 0 : i64, tpu.core_type = #tpu.core_type<tc>, window_params = [{transform_indices = @transform_0, window_bounds = array<i64: 2, 256>}, {transform_indices = @transform_1, window_bounds = array<i64: 1, 256>}, {transform_indices = @transform_2, window_bounds = array<i64: 2, 256>}]} {
    %c0 = arith.constant 0 : index
    %c0_0 = arith.constant 0 : index
    %0 = vector.load %arg2[%c0, %c0_0] : memref<2x256xf32, #tpu.memory_space<vmem>>, vector<2x256xf32>
    %c0_1 = arith.constant 0 : index
    %c0_2 = arith.constant 0 : index
    %1 = vector.load %arg3[%c0_1, %c0_2] : memref<1x256xf32, #tpu.memory_space<vmem>>, vector<1x256xf32>
    %2 = vector.broadcast %1 : vector<1x256xf32> to vector<2x256xf32>
    %3 = arith.addf %0, %2 : vector<2x256xf32>
    %c0_3 = arith.constant 0 : index
    %c0_4 = arith.constant 0 : index
    %4 = vector.load %arg4[%c0_3, %c0_4] : memref<2x256xf32, #tpu.memory_space<vmem>>, vector<2x256xf32>
    tpu.vector_store %arg4[%c0_3, %c0_4], %3 {strides = array<i32>} : memref<2x256xf32, #tpu.memory_space<vmem>>, vector<2x256xf32>,
    return
  }
  func.func @transform_0(%arg0: i32, %arg1: i32) -> (i32, i32) {
    %c0_i32 = arith.constant 0 : i32
    return %arg1, %arg0 : i32, i32
  }
  func.func @transform_1(%arg0: i32, %arg1: i32) -> (i32, i32) {
    %c0_i32 = arith.constant 0 : i32
    %c0_i32_0 = arith.constant 0 : i32
    return %c0_i32, %arg0 : i32, i32
  }
  func.func @transform_2(%arg0: i32, %arg1: i32) -> (i32, i32) {
    %c0_i32 = arith.constant 0 : i32
    return %arg1, %arg0 : i32, i32
  }
}

</mosaic_0001>

<llo_original>
// kernel: tpu_custom_call.1
$region0: #{tpu_custom_call.1}
  #allocation0 [shape = 'u32[]', space=smem, size = 0x4, offset = 0x4, fixed_abs, tag = 'smem constant byte address 0x4 - core index']
  #allocation1 [shape = 'u32[144,128]{1,0:T(1,128)}', space=vmem, size = 0x12000, scoped, tag = 'internal scratch']
  %s0 = inlined_call_operand.hbm [shape: f32[2,256], index: 0, kind: input, shape index: {}]
  %s1 = inlined_call_operand.vmem [shape: f32[1,256], index: 1, kind: input, shape index: {}]
  %s2 = inlined_call_operand.hbm [shape: f32[2,256], index: 2, kind: output, shape index: {}]
  %s3 = sld [smem:[#allocation0]]
  $region22: #{tpu_custom_call.1} parent=0
    _
  %s5 = ssub.s32 1, %s3
  %s6 = scalar_select 0, %s5, %s3
  $region1: #{tpu_custom_call.1} parent=0
    #allocation2 [shape = 'u8[2048]{0}', space=vmem, size = 0x800, scoped, tag = 'input window, operand 0, single buffered']
    #allocation3 [shape = 's32[1]{0}', space=sflag, size = 0x4, scoped, tag = 'scoped memory for tpu_custom_call.1']
    #allocation4 [shape = 's32[1]{0}', space=sflag, size = 0x4, scoped, tag = 'scoped memory for tpu_custom_call.1']
    #allocation5 [shape = 'u8[2048]{0}', space=vmem, size = 0x800, scoped, tag = 'output window, operand 0, single buffered']
    %7 = vsyncpa [#allocation3], 0
    %8 = vsyncpa [#allocation4], 0
    // Predicated region
    $region2: #{tpu_custom_call.1} parent=1 // pred_check
      _
    $region3: #{tpu_custom_call.1} parent=1 // pred_check_branch
      %10 = sbr.rel (0) target = $region5
    $region4: #{tpu_custom_call.1} parent=1 // pred_region
      %s12 = ssub.s32 64, 64
      %13 = vsyncadd [#allocation3], %s12
      %s15 = sshll.u32 [#allocation2], 4
      %s16 = int_to_ptr.vmem [resolvable:$true] %s15
      %18 = dma.hbm_to_vmem [thread:$0]  %s0, 64, %s16, [#allocation3]
    $region5: #{tpu_custom_call.1} parent=1 // pred_fallthru
      _
    // Predicated region
    $region6: #{tpu_custom_call.1} parent=1 // pred_check
      _
    $region7: #{tpu_custom_call.1} parent=1 // pred_check_branch
      %20 = sbr.rel (0) target = $region9
    $region8: #{tpu_custom_call.1} parent=1 // pred_region
      _
    $region9: #{tpu_custom_call.1} parent=1 // pred_fallthru
      _
    // Predicated region
    $region10: #{tpu_custom_call.1} parent=1 // pred_check
      _
    $region11: #{tpu_custom_call.1} parent=1 // pred_check_branch
      %22 = sbr.rel (0) target = $region13
    $region12: #{tpu_custom_call.1} parent=1 // pred_region
      %23 = dma.done [#allocation3], 64
    $region13: #{tpu_custom_call.1} parent=1 // pred_fallthru
      _
    %v24 = vld [vmem:[#allocation2] sm:$0xf]
    %v25 = vld [vmem:[%s1] sm:$0x3]
    %v27 = vlaneseq
    %v28 = vshrl.u32 %v27, 7
    %v29 = vsub.s32 0, %v28
    %v30 = vrot.slane %v25, %v29
    %v31 = vlaneseq
    %v32 = vshrl.u32 %v31, 7
    %v33 = vsub.s32 1, %v32
    %v34 = vrot.slane %v25, %v33
    %v35 = vcombine.low %v30, %v34
    %v37 = vunpack.c.l.s4 1983009808
    %v38 = vunpack.c.0.s8 %v37
    %v39 = vlaneseq
    %v40 = vshrl.u32 %v39, 7
    %v41 = vsub.s32 %v38, %v40
    %v42 = vrot.slane %v35, %v41
    %v44 = vadd.f32 %v24, %v42
    %45 = vst [vmem:[#allocation5] sm:$0xf] %v44
    // Predicated region
    $region14: #{tpu_custom_call.1} parent=1 // pred_check
      _
    $region15: #{tpu_custom_call.1} parent=1 // pred_check_branch
      %47 = sbr.rel (0) target = $region17
    $region16: #{tpu_custom_call.1} parent=1 // pred_region
      %s49 = ssub.s32 64, 64
      %50 = vsyncadd [#allocation4], %s49
      %s52 = sshll.u32 [#allocation5], 4
      %s53 = int_to_ptr.vmem [resolvable:$true] %s52
      %55 = dma.vmem_to_hbm [thread:$0]  %s53, 64, %s2, [#allocation4]
    $region17: #{tpu_custom_call.1} parent=1 // pred_fallthru
      _
    // Predicated region
    $region18: #{tpu_custom_call.1} parent=1 // pred_check
      _
    $region19: #{tpu_custom_call.1} parent=1 // pred_check_branch
      %57 = sbr.rel (0) target = $region21
    $region20: #{tpu_custom_call.1} parent=1 // pred_region
      %58 = dma.done [#allocation4], 64
    $region21: #{tpu_custom_call.1} parent=1 // pred_fallthru
      _
    %59 = vsyncpa [#allocation3], 1
    %60 = vsyncpa [#allocation4], 1

</llo_original>
